<compile_context>
chip_gen: v5e
topology: v5e:2x2
jax: 0.10.0
libtpu: 0.0.40
codegen_flags: <defaults>
</compile_context>

<pallas_src>
import jax
import jax.numpy as jnp
from jax.experimental import pallas as pl
from jax.experimental.pallas import tpu as pltpu


def _affine_kernel(x_ref, scale_ref, bias_ref, out_ref):
    # x_ref / out_ref: data tile; scale_ref / bias_ref broadcast over the
    # trailing (spatial) dims.  Works for both the 2-D and 3-D layouts.
    x = x_ref[...].astype(jnp.float32)
    out_ref[...] = (x * scale_ref[...] + bias_ref[...]).astype(out_ref.dtype)


def _round_down(x, m):
    return (x // m) * m


def normalization_forward(img, mean, std, *,
                          target_block_bytes=4 << 20,
                          min_pallas_bytes=1 << 20):
    """img: (N, C, H, W); mean, std: (C,).

    Returns (img - mean[:, None, None]) / std[:, None, None] (PyTorch semantics).
    Note: std == 0 yields inf/nan, matching PyTorch's divide semantics.
    """
    N, C, H, W = img.shape
    R, L = N * C, H * W
    itemsize = jnp.dtype(img.dtype).itemsize
    total_bytes = R * L * itemsize

    # Per-row affine: y = x * (1/std) + (-mean/std); rows ordered (n, c).
    inv_std = 1.0 / std.astype(jnp.float32)
    scale_rows = jnp.tile(inv_std, N)
    bias_rows = jnp.tile(-mean.astype(jnp.float32) * inv_std, N)

    # Small-input cutoff: skip the kernel, it's pure launch overhead here.
    # TODO(synk): for end-to-end wins, fuse this affine into the consumer
    # (first conv / patch-embed) instead of a standalone HBM round trip.
    if total_bytes < min_pallas_bytes:
        y = (img.astype(jnp.float32) * scale_rows.reshape(N, C, 1, 1)
             + bias_rows.reshape(N, C, 1, 1))
        return y.astype(img.dtype)

    # Native sublane packing of the dtype: f32 -> 8, bf16/f16 -> 16, int8 -> 32.
    pack = max(8, 32 // itemsize)
    budget = max(target_block_bytes, 128 * pack * itemsize)

    compiler_params_2d = pltpu.CompilerParams(
        dimension_semantics=("parallel", "parallel"),
        vmem_limit_bytes=32 << 20,
    )
    compiler_params_3d = pltpu.CompilerParams(
        dimension_semantics=("parallel", "parallel", "parallel"),
        vmem_limit_bytes=32 << 20,
    )

    lane_ok = (L % 128 == 0)
    # Sublane alignment available for the row dim (prefer native packing).
    r_align = pack if R % pack == 0 else (8 if R % 8 == 0 else None)

    if lane_ok and (r_align is not None or R * 128 * itemsize <= budget):
        # -------- lane-dense 2-D path: (R, L) --------  (reshape is metadata-only)
        x = img.reshape(R, L)
        scale = scale_rows.reshape(R, 1)
        bias = bias_rows.reshape(R, 1)

        if r_align is not None:
            block_cols = min(L, max(128, _round_down(budget // (r_align * itemsize), 128)))
            rows_fit = budget // (block_cols * itemsize)
            block_rows = min(R, max(r_align, _round_down(rows_fit, r_align)))
        else:
            # R not sublane-aligned: take all rows, budget the lane dim instead.
            block_rows = R
            block_cols = min(L, max(128, _round_down(budget // (R * itemsize), 128)))

        # v7x megacore: guarantee >= 2 grid points for non-trivial inputs so
        # both TensorCores get work (no effect on 1-TC v5e/v6e).
        if block_rows >= R and block_cols >= L and total_bytes >= (1 << 20):
            if block_cols >= 256:
                block_cols = max(128, _round_down(block_cols // 2, 128))
            elif r_align is not None and block_rows >= 2 * r_align:
                block_rows = max(r_align, _round_down(block_rows // 2, r_align))

        grid = (pl.cdiv(R, block_rows), pl.cdiv(L, block_cols))

        out_flat = pl.pallas_call(
            _affine_kernel,
            out_shape=jax.ShapeDtypeStruct((R, L), img.dtype),
            grid=grid,
            in_specs=[
                pl.BlockSpec((block_rows, block_cols), lambda i, j: (i, j)),
                pl.BlockSpec((block_rows, 1), lambda i, j: (i, 0)),
                pl.BlockSpec((block_rows, 1), lambda i, j: (i, 0)),
            ],
            out_specs=pl.BlockSpec((block_rows, block_cols), lambda i, j: (i, j)),
            compiler_params=compiler_params_2d,
        )(x, scale, bias)
        return out_flat.reshape(N, C, H, W)

    # -------- 3-D fallback path: (R, H, W) --------
    # The leading dim R has no (8,128) constraint, so the byte budget is always
    # respected down to a single (block_h, block_w) slab per grid step.
    x = img.reshape(R, H, W)
    scale = scale_rows.reshape(R, 1, 1)
    bias = bias_rows.reshape(R, 1, 1)

    if W % 128 == 0:
        block_w = min(W, max(128, _round_down(budget // (pack * itemsize), 128)))
    else:
        block_w = W  # full dim -> always legal
    h_align = pack if H % pack == 0 else (8 if H % 8 == 0 else None)
    if h_align is not None:
        block_h = min(H, max(h_align, _round_down(budget // (block_w * itemsize), h_align)))
    else:
        block_h = H  # full dim -> always legal
    block_r = max(1, min(R, budget // (block_h * block_w * itemsize)))

    grid = (pl.cdiv(R, block_r), pl.cdiv(H, block_h), pl.cdiv(W, block_w))

    out3 = pl.pallas_call(
        _affine_kernel,
        out_shape=jax.ShapeDtypeStruct((R, H, W), img.dtype),
        grid=grid,
        in_specs=[
            pl.BlockSpec((block_r, block_h, block_w), lambda r, h, w: (r, h, w)),
            pl.BlockSpec((block_r, 1, 1), lambda r, h, w: (r, 0, 0)),
            pl.BlockSpec((block_r, 1, 1), lambda r, h, w: (r, 0, 0)),
        ],
        out_specs=pl.BlockSpec((block_r, block_h, block_w), lambda r, h, w: (r, h, w)),
        compiler_params=compiler_params_3d,
    )(x, scale, bias)
    return out3.reshape(N, C, H, W)


if __name__ == "__main__":
    key = jax.random.PRNGKey(0)
    k1, k2, k3 = jax.random.split(key, 3)

    def ref_norm(img, mean, std):
        return (img - mean.reshape(-1, 1, 1)) / std.reshape(-1, 1, 1)

    # --- Case 1: aligned shape -> lane-dense 2-D path (forced through Pallas) ---
    N, C, H, W = 2, 4, 16, 16
    img = jax.random.normal(k1, (N, C, H, W), dtype=jnp.float32)
    mean = jnp.array([0.485, 0.456, 0.406, 0.450], dtype=jnp.float32)
    std = jnp.array([0.229, 0.224, 0.225, 0.230], dtype=jnp.float32)
    out = jax.block_until_ready(normalization_forward(img, mean, std, min_pallas_bytes=0))
    assert out.shape == (N, C, H, W)
    assert jnp.allclose(out, ref_norm(img, mean, std), atol=1e-5, rtol=1e-5)

    # --- Case 2: R not a multiple of 8 (C=3, N=1) -> budget-aware 2-D fallback ---
    img2 = jax.random.normal(k2, (1, 3, 16, 16), dtype=jnp.float32)
    mean3 = jnp.array([0.485, 0.456, 0.406], dtype=jnp.float32)
    std3 = jnp.array([0.229, 0.224, 0.225], dtype=jnp.float32)
    out2 = jax.block_until_ready(normalization_forward(img2, mean3, std3, min_pallas_bytes=0))
    assert jnp.allclose(out2, ref_norm(img2, mean3, std3), atol=1e-5, rtol=1e-5)

    # --- Case 3: non-128-aligned spatial dims -> 3-D (R, H, W) path ---
    img3 = jax.random.normal(k3, (2, 3, 17, 33), dtype=jnp.float32)
    out3 = jax.block_until_ready(normalization_forward(img3, mean3, std3, min_pallas_bytes=0))
    assert jnp.allclose(out3, ref_norm(img3, mean3, std3), atol=1e-5, rtol=1e-5)

    print("KERNEL_OK")
</pallas_src>

<mosaic_0001>
module attributes {stable_mosaic.version = 11 : i64} {
  func.func @_affine_kernel(%arg0: i32, %arg1: i32, %arg2: memref<8x256xf32, #tpu.memory_space<vmem>>, %arg3: memref<8x1xf32, #tpu.memory_space<vmem>>, %arg4: memref<8x1xf32, #tpu.memory_space<vmem>>, %arg5: memref<8x256xf32, #tpu.memory_space<vmem>>) attributes {dimension_semantics = [#tpu.dimension_semantics<parallel>, #tpu.dimension_semantics<parallel>], iteration_bounds = array<i64: 1, 1>, scalar_prefetch = 0 : i64, scratch_operands = 0 : i64, tpu.core_type = #tpu.core_type<tc>, window_params = [{transform_indices = @transform_0, window_bounds = array<i64: 8, 256>}, {transform_indices = @transform_1, window_bounds = array<i64: 8, 1>}, {transform_indices = @transform_2, window_bounds = array<i64: 8, 1>}, {transform_indices = @transform_3, window_bounds = array<i64: 8, 256>}]} {
    %c0 = arith.constant 0 : index
    %c0_0 = arith.constant 0 : index
    %0 = vector.load %arg2[%c0, %c0_0] : memref<8x256xf32, #tpu.memory_space<vmem>>, vector<8x256xf32>
    %c0_1 = arith.constant 0 : index
    %c0_2 = arith.constant 0 : index
    %1 = vector.load %arg3[%c0_1, %c0_2] : memref<8x1xf32, #tpu.memory_space<vmem>>, vector<8x1xf32>
    %2 = vector.broadcast %1 : vector<8x1xf32> to vector<8x256xf32>
    %3 = arith.mulf %0, %2 : vector<8x256xf32>
    %c0_3 = arith.constant 0 : index
    %c0_4 = arith.constant 0 : index
    %4 = vector.load %arg4[%c0_3, %c0_4] : memref<8x1xf32, #tpu.memory_space<vmem>>, vector<8x1xf32>
    %5 = vector.broadcast %4 : vector<8x1xf32> to vector<8x256xf32>
    %6 = arith.addf %3, %5 : vector<8x256xf32>
    %c0_5 = arith.constant 0 : index
    %c0_6 = arith.constant 0 : index
    %7 = vector.load %arg5[%c0_5, %c0_6] : memref<8x256xf32, #tpu.memory_space<vmem>>, vector<8x256xf32>
    tpu.vector_store %arg5[%c0_5, %c0_6], %6 {strides = array<i32>} : memref<8x256xf32, #tpu.memory_space<vmem>>, vector<8x256xf32>,
    return
  }
  func.func @transform_0(%arg0: i32, %arg1: i32) -> (i32, i32) {
    %c0_i32 = arith.constant 0 : i32
    return %arg0, %arg1 : i32, i32
  }
  func.func @transform_1(%arg0: i32, %arg1: i32) -> (i32, i32) {
    %c0_i32 = arith.constant 0 : i32
    %c0_i32_0 = arith.constant 0 : i32
    return %arg0, %c0_i32 : i32, i32
  }
  func.func @transform_2(%arg0: i32, %arg1: i32) -> (i32, i32) {
    %c0_i32 = arith.constant 0 : i32
    %c0_i32_0 = arith.constant 0 : i32
    return %arg0, %c0_i32 : i32, i32
  }
  func.func @transform_3(%arg0: i32, %arg1: i32) -> (i32, i32) {
    %c0_i32 = arith.constant 0 : i32
    return %arg0, %arg1 : i32, i32
  }
}

</mosaic_0001>

<llo_original>
// kernel: tpu_custom_call.1
$region0: #{tpu_custom_call.1}
  #allocation0 [shape = 'u32[]', space=smem, size = 0x4, offset = 0x4, fixed_abs, tag = 'smem constant byte address 0x4 - core index']
  #allocation1 [shape = 'u32[72,128]{1,0:T(1,128)}', space=vmem, size = 0x9000, scoped, tag = 'internal scratch']
  %s0 = inlined_call_operand.vmem [shape: f32[8,256], index: 0, kind: input, shape index: {}]
  %s1 = inlined_call_operand.vmem [shape: f32[8,1], index: 1, kind: input, shape index: {}]
  %s2 = inlined_call_operand.vmem [shape: f32[8,1], index: 2, kind: input, shape index: {}]
  %s3 = inlined_call_operand.hbm [shape: f32[8,256], index: 3, kind: output, shape index: {}]
  %s4 = sld [smem:[#allocation0]]
  $region22: #{tpu_custom_call.1} parent=0
    _
  %s6 = ssub.s32 1, %s4
  %s7 = scalar_select 0, %s6, %s4
  $region1: #{tpu_custom_call.1} parent=0
    #allocation2 [shape = 'u8[8192]{0}', space=vmem, size = 0x2000, scoped, tag = 'output window, operand 0, single buffered']
    #allocation3 [shape = 's32[1]{0}', space=sflag, size = 0x4, scoped, tag = 'scoped memory for tpu_custom_call.1']
    %8 = vsyncpa [#allocation3], 0
    // Predicated region
    $region2: #{tpu_custom_call.1} parent=1 // pred_check
      _
    $region3: #{tpu_custom_call.1} parent=1 // pred_check_branch
      %10 = sbr.rel (0) target = $region5
    $region4: #{tpu_custom_call.1} parent=1 // pred_region
      _
    $region5: #{tpu_custom_call.1} parent=1 // pred_fallthru
      _
    // Predicated region
    $region6: #{tpu_custom_call.1} parent=1 // pred_check
      _
    $region7: #{tpu_custom_call.1} parent=1 // pred_check_branch
      %12 = sbr.rel (0) target = $region9
    $region8: #{tpu_custom_call.1} parent=1 // pred_region
      _
    $region9: #{tpu_custom_call.1} parent=1 // pred_fallthru
      _
    // Predicated region
    $region10: #{tpu_custom_call.1} parent=1 // pred_check
      _
    $region11: #{tpu_custom_call.1} parent=1 // pred_check_branch
      %14 = sbr.rel (0) target = $region13
    $region12: #{tpu_custom_call.1} parent=1 // pred_region
      _
    $region13: #{tpu_custom_call.1} parent=1 // pred_fallthru
      _
    %v15 = vld [vmem:[%s0] sm:$0xff]
    %v16 = vld [vmem:[%s0 + $0x8] sm:$0xff]
    %v17 = vld [vmem:[%s1] sm:$0xff]
    %19 = vset.pattern.permute.xlu0 0
    %20 = vperm.xlu0 %19, %v17
    %v21 = vpop.permute.xlu0 %20
    %v23 = vmul.f32 %v15, %v21
    %v24 = vmul.f32 %v16, %v21
    %v25 = vld [vmem:[%s2] sm:$0xff]
    %27 = vset.pattern.permute.xlu0 0
    %28 = vperm.xlu0 %27, %v25
    %v29 = vpop.permute.xlu0 %28
    %v31 = vadd.f32 %v23, %v29
    %v32 = vadd.f32 %v24, %v29
    %33 = vst [vmem:[#allocation2] sm:$0xff] %v31
    %34 = vst [vmem:[#allocation2 + $0x8] sm:$0xff] %v32
    // Predicated region
    $region14: #{tpu_custom_call.1} parent=1 // pred_check
      _
    $region15: #{tpu_custom_call.1} parent=1 // pred_check_branch
      %36 = sbr.rel (0) target = $region17
    $region16: #{tpu_custom_call.1} parent=1 // pred_region
      %38 = vsyncadd [#allocation3], 0
      %s40 = sshll.u32 [#allocation2], 4
      %s41 = int_to_ptr.vmem [resolvable:$true] %s40
      %s42 = sshll.u32 %s3, 4
      %s43 = int_to_ptr.hbm [resolvable:$true] %s42
      %45 = dma.vmem_to_hbm [thread:$0]  %s41, 256, %s43, [#allocation3]
    $region17: #{tpu_custom_call.1} parent=1 // pred_fallthru
      _
    // Predicated region
    $region18: #{tpu_custom_call.1} parent=1 // pred_check
      _
    $region19: #{tpu_custom_call.1} parent=1 // pred_check_branch
      %47 = sbr.rel (0) target = $region21
    $region20: #{tpu_custom_call.1} parent=1 // pred_region
      %49 = dma.done [#allocation3], 256
    $region21: #{tpu_custom_call.1} parent=1 // pred_fallthru
      _
    %50 = vsyncpa [#allocation3], 1

</llo_original>
